<compile_context>
chip_gen: v6e
topology: v6e:2x2x1
jax: 0.10.0
libtpu: 0.0.40
codegen_flags: <defaults>
</compile_context>

<pallas_src>
import functools

import jax
import jax.numpy as jnp
from jax import lax
from jax.experimental import pallas as pl
from jax.experimental.pallas import tpu as pltpu

BN_EPS = 1e-4
SN_EPS = 1e-6

_MAX_STATS_LANES = 4096  # caps pass-1 tile width -> bounds in-kernel chunk unroll


def _round_up(v, m):
    return (v + m - 1) // m * m


def _budgets():
    """(vmem_limit_bytes, per-block byte budget) - TPU-generation aware."""
    try:
        vmem_cap = int(pltpu.get_tpu_info().vmem_capacity_bytes)
    except Exception:  # unknown chip / interpret mode -> conservative (v7x-like)
        vmem_cap = 64 * 1024 * 1024
    if vmem_cap >= 96 * 1024 * 1024:              # v5e / v6e: 128 MiB physical VMEM
        return 64 * 1024 * 1024, 6 * 1024 * 1024
    return 32 * 1024 * 1024, 2 * 1024 * 1024      # v7x: 64 MiB physical per core


def _choose_tile_hw(hw_pad, n_rows, itemsize, budget_bytes, max_lanes=None):
    """Largest multiple of 128 that divides hw_pad and fits the per-block budget."""
    limit = max(128, (budget_bytes // max(1, n_rows * itemsize)) // 128 * 128)
    if max_lanes is not None:
        limit = min(limit, max(128, max_lanes))
    best = 128
    t = 128
    while t <= hw_pad:
        if hw_pad % t == 0 and t <= limit:
            best = t
        t += 128
    return best


# ---------------------------------------------------------------------------
# Pass 1: per-sample, per-channel sum / sum-of-squares (single traversal of x)
# ---------------------------------------------------------------------------
def _stats_kernel(x_ref, sum_ref, sq_ref, acc_s_ref, acc_q_ref):
    # x_ref:   (1, C, T) input tile, T % 128 == 0
    # sum_ref: (1, C, 1) f32 per-sample partial sums (resident across the t axis)
    # sq_ref:  (1, C, 1) f32 per-sample partial sum-of-squares
    # acc_*:   (1, C, 128) f32 lane-parallel accumulators (VMEM scratch)
    t = pl.program_id(1)

    @pl.when(t == 0)
    def _():
        acc_s_ref[...] = jnp.zeros_like(acc_s_ref)
        acc_q_ref[...] = jnp.zeros_like(acc_q_ref)

    # Static, lane-aligned 128-wide chunks: pure VALU adds into the lane-parallel
    # accumulators (no per-tile cross-lane XLU reduce, no relayout of C).
    for j in range(x_ref.shape[2] // 128):
        chunk = x_ref[:, :, pl.ds(j * 128, 128)].astype(jnp.float32)   # (1, C, 128)
        acc_s_ref[...] += chunk
        acc_q_ref[...] += chunk * chunk

    # Collapse lanes only once per sample.
    @pl.when(t == pl.num_programs(1) - 1)
    def _():
        sum_ref[...] = jnp.sum(acc_s_ref[...], axis=2, keepdims=True)
        sq_ref[...] = jnp.sum(acc_q_ref[...], axis=2, keepdims=True)


# ---------------------------------------------------------------------------
# Pass 2: elementwise normalize + conditional affine, folded to out = x*s + t
# ---------------------------------------------------------------------------
def _norm_kernel(x_ref, s_ref, t_ref, o_ref):
    # x_ref/o_ref: (1, C, T); s_ref/t_ref: (1, C, 1) f32
    x = x_ref[...].astype(jnp.float32)
    o_ref[...] = (x * s_ref[...] + t_ref[...]).astype(o_ref.dtype)


def _tiled_forward(x3, gain, bias, count, vmem_limit, tile_budget,
                   donate_x, max_tile_lanes):
    N, C, HWp = x3.shape
    bud_itemsize = max(jnp.dtype(x3.dtype).itemsize, 4)   # kernels upcast to f32

    # -------- pass 1: batch statistics --------
    stats_cap = (_MAX_STATS_LANES if max_tile_lanes is None
                 else min(_MAX_STATS_LANES, max_tile_lanes))
    tile1 = _choose_tile_hw(HWp, C, bud_itemsize, tile_budget, max_lanes=stats_cap)
    nt1 = HWp // tile1
    sums, sqs = pl.pallas_call(
        _stats_kernel,
        grid=(N, nt1),
        out_shape=(jax.ShapeDtypeStruct((N, C, 1), jnp.float32),
                   jax.ShapeDtypeStruct((N, C, 1), jnp.float32)),
        in_specs=[pl.BlockSpec((1, C, tile1), lambda n, t: (n, 0, t))],
        out_specs=(pl.BlockSpec((1, C, 1), lambda n, t: (n, 0, 0)),
                   pl.BlockSpec((1, C, 1), lambda n, t: (n, 0, 0))),
        scratch_shapes=[pltpu.VMEM((1, C, 128), jnp.float32),
                        pltpu.VMEM((1, C, 128), jnp.float32)],
        compiler_params=pltpu.CompilerParams(
            dimension_semantics=("parallel", "arbitrary"),
            vmem_limit_bytes=vmem_limit),
    )(x3)

    # -------- tiny glue: fold stats + conditional affine into per-(N,C) s/t ----
    mean = jnp.sum(sums, axis=(0, 2)) / count                           # (C,)
    var = jnp.maximum(jnp.sum(sqs, axis=(0, 2)) / count - mean * mean, 0.0)
    inv = lax.rsqrt(var + BN_EPS)                                       # (C,)
    s = gain * inv[None, :]                                             # (N, C)
    t = bias - mean[None, :] * s                                        # (N, C)
    s3 = s[:, :, None]
    t3 = t[:, :, None]

    # -------- pass 2: out = x*s + t (fully parallel, lane-dense stores) --------
    tile2 = _choose_tile_hw(HWp, C, bud_itemsize, tile_budget,
                            max_lanes=max_tile_lanes)
    nt2 = HWp // tile2
    return pl.pallas_call(
        _norm_kernel,
        grid=(N, nt2),
        out_shape=jax.ShapeDtypeStruct((N, C, HWp), x3.dtype),
        in_specs=[
            pl.BlockSpec((1, C, tile2), lambda n, j: (n, 0, j)),
            pl.BlockSpec((1, C, 1), lambda n, j: (n, 0, 0)),
            pl.BlockSpec((1, C, 1), lambda n, j: (n, 0, 0)),
        ],
        out_specs=pl.BlockSpec((1, C, tile2), lambda n, j: (n, 0, j)),
        input_output_aliases={0: 0} if donate_x else {},
        compiler_params=pltpu.CompilerParams(
            dimension_semantics=("parallel", "parallel"),
            vmem_limit_bytes=vmem_limit),
    )(x3, s3, t3)


def _fused_forward(x3, gain, bias, count, vmem_limit):
    """Single VMEM-resident kernel: stats + normalize (2x HBM traffic, one launch)."""
    N, C, HWp = x3.shape
    inv_count = 1.0 / count
    gain3 = gain[:, :, None]          # (N, C, 1)
    bias3 = bias[:, :, None]

    def kernel(x_ref, g_ref, b_ref, o_ref):
        x = x_ref[...].astype(jnp.float32)                      # (N, C, HWp)
        sums = jnp.sum(x, axis=(0, 2), keepdims=True)           # (1, C, 1)
        sqs = jnp.sum(x * x, axis=(0, 2), keepdims=True)
        mean = sums * inv_count
        var = jnp.maximum(sqs * inv_count - mean * mean, 0.0)
        inv = lax.rsqrt(var + BN_EPS)
        s = g_ref[...] * inv                                     # (N, C, 1)
        t = b_ref[...] - mean * s
        o_ref[...] = (x * s + t).astype(o_ref.dtype)

    vmem = pl.BlockSpec(memory_space=pltpu.MemorySpace.VMEM)
    return pl.pallas_call(
        kernel,
        out_shape=jax.ShapeDtypeStruct((N, C, HWp), x3.dtype),
        in_specs=[vmem, vmem, vmem],
        out_specs=vmem,
        compiler_params=pltpu.CompilerParams(vmem_limit_bytes=vmem_limit),
    )(x3, gain3, bias3)


def conditional_batchnorm2d(x, y, w_gain_sn, w_bias_sn, *,
                            use_fused=None, donate_x=False, max_tile_lanes=None):
    """x: (N, C, H, W), y: (N, F), w_*_sn: spectrally-normalized (C, F) weights."""
    N, C, H, W = x.shape
    HW = H * W
    HWp = _round_up(max(HW, 128), 128)          # lane-align spatial axis
    vmem_limit, tile_budget = _budgets()

    x3 = x.reshape(N, C, HW)
    if HWp != HW:
        # Zero padding contributes 0 to sum/sumsq; count below uses the real HW.
        x3 = jnp.pad(x3, ((0, 0), (0, 0), (0, HWp - HW)))

    # Conditional affine: tiny (N,F)x(F,C) matmuls -> plain-JAX glue.
    yf = y.astype(jnp.float32)
    gain = 1.0 + jnp.dot(yf, w_gain_sn.astype(jnp.float32).T)   # (N, C)
    bias = jnp.dot(yf, w_bias_sn.astype(jnp.float32).T)         # (N, C)

    count = float(N * HW)
    itemsize = jnp.dtype(x.dtype).itemsize

    if use_fused is None:
        use_fused = N * C * HWp * (2 * itemsize + 12) <= vmem_limit // 2

    if use_fused:
        out3 = _fused_forward(x3, gain, bias, count, vmem_limit)
    else:
        out3 = _tiled_forward(x3, gain, bias, count, vmem_limit, tile_budget,
                              donate_x, max_tile_lanes)

    if HWp != HW:
        out3 = out3[:, :, :HW]
    return out3.reshape(N, C, H, W)


# ---------------------------------------------------------------------------
# Spectral norm "parameter glue" (one power iteration, as in torch training fwd)
# ---------------------------------------------------------------------------
def spectral_normalize(w, u, n_power_iterations=1, eps=SN_EPS):
    def _norm(v):
        return v / (jnp.linalg.norm(v) + eps)

    v = None
    for _ in range(n_power_iterations):
        v = _norm(w.T @ u)
        u = _norm(w @ v)
    sigma = jnp.dot(u, w @ v)
    return w / sigma


if __name__ == "__main__":
    key = jax.random.PRNGKey(0)
    keys = jax.random.split(key, 12)
    F_IN = 16

    def reference(x, y, wg, wb):
        mean = jnp.mean(x, axis=(0, 2, 3), keepdims=True)
        var = jnp.mean((x - mean) ** 2, axis=(0, 2, 3), keepdims=True)
        xhat = (x - mean) / jnp.sqrt(var + BN_EPS)
        gain = (1.0 + y @ wg.T)[:, :, None, None]
        bias = (y @ wb.T)[:, :, None, None]
        return xhat * gain + bias

    # ---- case 1: small feature map -> fused single-pass path ----------------
    N, C, H, W = 2, 8, 16, 16
    x = jax.random.normal(keys[0], (N, C, H, W), dtype=jnp.float32)
    y = jax.random.normal(keys[1], (N, F_IN), dtype=jnp.float32)
    wg = jax.random.normal(keys[2], (C, F_IN), dtype=jnp.float32) * 0.1
    wb = jax.random.normal(keys[3], (C, F_IN), dtype=jnp.float32) * 0.1
    ug = jax.random.normal(keys[4], (C,), dtype=jnp.float32)
    ub = jax.random.normal(keys[5], (C,), dtype=jnp.float32)
    wg_sn = spectral_normalize(wg, ug)
    wb_sn = spectral_normalize(wb, ub)

    fused_fwd = jax.jit(functools.partial(conditional_batchnorm2d, use_fused=True))
    out = jax.block_until_ready(fused_fwd(x, y, wg_sn, wb_sn))
    ref = reference(x, y, wg_sn, wb_sn)
    assert jnp.allclose(out, ref, atol=1e-3, rtol=1e-3), "fused path mismatch"

    # ---- case 2: two-pass tiled path (HW not a multiple of 128 -> padding;
    #      small max_tile_lanes forces a real multi-tile reduction grid) -------
    N2, C2, H2, W2 = 3, 16, 20, 20
    x2 = jax.random.normal(keys[6], (N2, C2, H2, W2), dtype=jnp.float32)
    y2 = jax.random.normal(keys[7], (N2, F_IN), dtype=jnp.float32)
    wg2 = jax.random.normal(keys[8], (C2, F_IN), dtype=jnp.float32) * 0.1
    wb2 = jax.random.normal(keys[9], (C2, F_IN), dtype=jnp.float32) * 0.1
    ug2 = jax.random.normal(keys[10], (C2,), dtype=jnp.float32)
    ub2 = jax.random.normal(keys[11], (C2,), dtype=jnp.float32)
    wg2_sn = spectral_normalize(wg2, ug2)
    wb2_sn = spectral_normalize(wb2, ub2)

    tiled_fwd = jax.jit(functools.partial(conditional_batchnorm2d,
                                          use_fused=False, max_tile_lanes=128))
    out2 = jax.block_until_ready(tiled_fwd(x2, y2, wg2_sn, wb2_sn))
    ref2 = reference(x2, y2, wg2_sn, wb2_sn)
    assert jnp.allclose(out2, ref2, atol=1e-3, rtol=1e-3), "tiled path mismatch"

    print("KERNEL_OK")
</pallas_src>

<mosaic_0001>
module attributes {stable_mosaic.version = 11 : i64} {
  func.func @kernel(%arg0: memref<2x8x256xf32, #tpu.memory_space<vmem>>, %arg1: memref<2x8x1xf32, #tpu.memory_space<vmem>>, %arg2: memref<2x8x1xf32, #tpu.memory_space<vmem>>, %arg3: memref<2x8x256xf32, #tpu.memory_space<vmem>>) attributes {dimension_semantics = [], scalar_prefetch = 0 : i64, scratch_operands = 0 : i64, tpu.core_type = #tpu.core_type<tc>} {
    %c0 = arith.constant 0 : index
    %c0_0 = arith.constant 0 : index
    %c0_1 = arith.constant 0 : index
    %0 = vector.load %arg0[%c0, %c0_0, %c0_1] : memref<2x8x256xf32, #tpu.memory_space<vmem>>, vector<2x8x256xf32>
    %cst = arith.constant dense<0.000000e+00> : vector<8xf32>
    %1 = vector.multi_reduction <add>, %0, %cst [0, 2] : vector<2x8x256xf32> to vector<8xf32>
    %2 = vector.shape_cast %1 : vector<8xf32> to vector<1x8x1xf32>
    %3 = arith.mulf %0, %0 : vector<2x8x256xf32>
    %cst_2 = arith.constant dense<0.000000e+00> : vector<8xf32>
    %4 = vector.multi_reduction <add>, %3, %cst_2 [0, 2] : vector<2x8x256xf32> to vector<8xf32>
    %5 = vector.shape_cast %4 : vector<8xf32> to vector<1x8x1xf32>
    %cst_3 = arith.constant 0.001953125 : f32
    %6 = vector.broadcast %cst_3 : f32 to vector<1x8x1xf32>
    %7 = arith.mulf %2, %6 : vector<1x8x1xf32>
    %cst_4 = arith.constant 0.001953125 : f32
    %8 = vector.broadcast %cst_4 : f32 to vector<1x8x1xf32>
    %9 = arith.mulf %5, %8 : vector<1x8x1xf32>
    %10 = arith.mulf %7, %7 : vector<1x8x1xf32>
    %11 = arith.subf %9, %10 : vector<1x8x1xf32>
    %cst_5 = arith.constant 0.000000e+00 : f32
    %12 = vector.broadcast %cst_5 : f32 to vector<1x8x1xf32>
    %13 = arith.maximumf %11, %12 : vector<1x8x1xf32>
    %cst_6 = arith.constant 9.99999974E-5 : f32
    %14 = vector.broadcast %cst_6 : f32 to vector<1x8x1xf32>
    %15 = arith.addf %13, %14 : vector<1x8x1xf32>
    %16 = math.rsqrt %15 : vector<1x8x1xf32>
    %c0_7 = arith.constant 0 : index
    %c0_8 = arith.constant 0 : index
    %c0_9 = arith.constant 0 : index
    %17 = vector.load %arg1[%c0_7, %c0_8, %c0_9] : memref<2x8x1xf32, #tpu.memory_space<vmem>>, vector<2x8x1xf32>
    %18 = vector.broadcast %16 : vector<1x8x1xf32> to vector<2x8x1xf32>
    %19 = arith.mulf %17, %18 : vector<2x8x1xf32>
    %c0_10 = arith.constant 0 : index
    %c0_11 = arith.constant 0 : index
    %c0_12 = arith.constant 0 : index
    %20 = vector.load %arg2[%c0_10, %c0_11, %c0_12] : memref<2x8x1xf32, #tpu.memory_space<vmem>>, vector<2x8x1xf32>
    %21 = vector.broadcast %7 : vector<1x8x1xf32> to vector<2x8x1xf32>
    %22 = arith.mulf %21, %19 : vector<2x8x1xf32>
    %23 = arith.subf %20, %22 : vector<2x8x1xf32>
    %24 = vector.broadcast %19 : vector<2x8x1xf32> to vector<2x8x256xf32>
    %25 = arith.mulf %0, %24 : vector<2x8x256xf32>
    %26 = vector.broadcast %23 : vector<2x8x1xf32> to vector<2x8x256xf32>
    %27 = arith.addf %25, %26 : vector<2x8x256xf32>
    %c0_13 = arith.constant 0 : index
    %c0_14 = arith.constant 0 : index
    %c0_15 = arith.constant 0 : index
    %28 = vector.load %arg3[%c0_13, %c0_14, %c0_15] : memref<2x8x256xf32, #tpu.memory_space<vmem>>, vector<2x8x256xf32>
    tpu.vector_store %arg3[%c0_13, %c0_14, %c0_15], %27 {strides = array<i32>} : memref<2x8x256xf32, #tpu.memory_space<vmem>>, vector<2x8x256xf32>,
    return
  }
}

</mosaic_0001>

<llo_original>
// kernel: conditional_batchnorm2d.1
$region0: #{conditional_batchnorm2d.1}
  #allocation0 [shape = 'u32[]', space=smem, size = 0x4, offset = 0x4, fixed_abs, tag = 'smem constant byte address 0x4 - core index']
  #allocation1 [shape = 'u32[144,128]{1,0:T(1,128)}', space=vmem, size = 0x12000, scoped, tag = 'internal scratch']
  %s0 = inlined_call_operand.vmem [shape: f32[2,8,256], index: 0, kind: input, shape index: {}]
  %s1 = inlined_call_operand.vmem [shape: f32[2,8,1], index: 1, kind: input, shape index: {}]
  %s2 = inlined_call_operand.vmem [shape: f32[2,8,1], index: 2, kind: input, shape index: {}]
  %s3 = inlined_call_operand.vmem [shape: f32[2,8,256], index: 3, kind: output, shape index: {}]
  %s4 = sld [smem:[#allocation0]]
  $region22: #{conditional_batchnorm2d.1} parent=0
    _
  %s6 = ssub.s32 1, %s4
  %s7 = scalar_select 0, %s6, %s4
  // Predicated region
  $region2: #{conditional_batchnorm2d.1} parent=0 // pred_check
    _
  $region3: #{conditional_batchnorm2d.1} parent=0 // pred_check_branch
    %9 = sbr.rel (0) target = $region5
  $region4: #{conditional_batchnorm2d.1} parent=0 // pred_region
    _
  $region5: #{conditional_batchnorm2d.1} parent=0 // pred_fallthru
    _
  // Predicated region
  $region6: #{conditional_batchnorm2d.1} parent=0 // pred_check
    _
  $region7: #{conditional_batchnorm2d.1} parent=0 // pred_check_branch
    %11 = sbr.rel (0) target = $region9
  $region8: #{conditional_batchnorm2d.1} parent=0 // pred_region
    _
  $region9: #{conditional_batchnorm2d.1} parent=0 // pred_fallthru
    _
  // Predicated region
  $region10: #{conditional_batchnorm2d.1} parent=0 // pred_check
    _
  $region11: #{conditional_batchnorm2d.1} parent=0 // pred_check_branch
    %13 = sbr.rel (0) target = $region13
  $region12: #{conditional_batchnorm2d.1} parent=0 // pred_region
    _
  $region13: #{conditional_batchnorm2d.1} parent=0 // pred_fallthru
    _
  %v14 = vld [vmem:[%s0] sm:$0xff]
  %v15 = vld [vmem:[%s0 + $0x8] sm:$0xff]
  %v16 = vld [vmem:[%s0 + $0x10] sm:$0xff]
  %v17 = vld [vmem:[%s0 + $0x18] sm:$0xff]
  %v18 = vadd.f32 %v14, %v15
  %v19 = vadd.f32 %v18, %v16
  %v20 = vadd.f32 %v19, %v17
  %21 = vadd.xlane.f32.xlu0 %v20
  %v22 = vpop.xlane.xlu0 %21
  %v23 = vmul.f32 %v14, %v14
  %v24 = vmul.f32 %v15, %v15
  %v25 = vmul.f32 %v16, %v16
  %v26 = vmul.f32 %v17, %v17
  %v27 = vadd.f32 %v23, %v24
  %v28 = vadd.f32 %v27, %v25
  %v29 = vadd.f32 %v28, %v26
  %30 = vadd.xlane.f32.xlu0 %v29
  %v31 = vpop.xlane.xlu0 %30
  %v32 = vmul.f32 %v22, 0.001953125
  %v33 = vmul.f32 %v31, 0.001953125
  %v34 = vmul.f32 %v32, %v32
  %v35 = vsub.f32 %v33, %v34
  %v36 = vmax.f32 %v35, 0.0
  %v37 = vadd.f32 %v36, 0.0001
  %v38 = vrsqrt.pop %v37
  %v39 = vld [vmem:[%s1] sm:$0xff]
  %v40 = vld [vmem:[%s1 + $0x8] sm:$0xff]
  %v41 = vmul.f32 %v39, %v38
  %v42 = vmul.f32 %v40, %v38
  %v43 = vld [vmem:[%s2] sm:$0xff]
  %v44 = vld [vmem:[%s2 + $0x8] sm:$0xff]
  %v45 = vmul.f32 %v32, %v41
  %v46 = vmul.f32 %v32, %v42
  %v47 = vsub.f32 %v43, %v45
  %v48 = vsub.f32 %v44, %v46
  %50 = vset.pattern.permute.xlu0 0
  %51 = vperm.xlu0 %50, %v41
  %v52 = vpop.permute.xlu0 %51
  %55 = vset.pattern.permute.xlu0 0
  %56 = vperm.xlu0 %55, %v42
  %v57 = vpop.permute.xlu0 %56
  %v59 = vmul.f32 %v14, %v52
  %v60 = vmul.f32 %v15, %v52
  %v61 = vmul.f32 %v16, %v57
  %v62 = vmul.f32 %v17, %v57
  %64 = vset.pattern.permute.xlu0 0
  %65 = vperm.xlu0 %64, %v47
  %v66 = vpop.permute.xlu0 %65
  %69 = vset.pattern.permute.xlu0 0
  %70 = vperm.xlu0 %69, %v48
  %v71 = vpop.permute.xlu0 %70
  %v73 = vadd.f32 %v59, %v66
  %v74 = vadd.f32 %v60, %v66
  %v75 = vadd.f32 %v61, %v71
  %v76 = vadd.f32 %v62, %v71
  %77 = vst [vmem:[%s3] sm:$0xff] %v73
  %78 = vst [vmem:[%s3 + $0x8] sm:$0xff] %v74
  %79 = vst [vmem:[%s3 + $0x10] sm:$0xff] %v75
  %80 = vst [vmem:[%s3 + $0x18] sm:$0xff] %v76
  // Predicated region
  $region14: #{conditional_batchnorm2d.1} parent=0 // pred_check
    _
  $region15: #{conditional_batchnorm2d.1} parent=0 // pred_check_branch
    %82 = sbr.rel (0) target = $region17
  $region16: #{conditional_batchnorm2d.1} parent=0 // pred_region
    _
  $region17: #{conditional_batchnorm2d.1} parent=0 // pred_fallthru
    _
  // Predicated region
  $region18: #{conditional_batchnorm2d.1} parent=0 // pred_check
    _
  $region19: #{conditional_batchnorm2d.1} parent=0 // pred_check_branch
    %84 = sbr.rel (0) target = $region21
  $region20: #{conditional_batchnorm2d.1} parent=0 // pred_region
    _
  $region21: #{conditional_batchnorm2d.1} parent=0 // pred_fallthru
    _

</llo_original>
